<compile_context>
chip_gen: v6e
topology: v6e:2x2x1
jax: 0.10.0
libtpu: 0.0.40
codegen_flags: <defaults>
</compile_context>

<pallas_src>
import jax
import jax.numpy as jnp
from jax.experimental import pallas as pl
from jax.experimental.pallas import tpu as pltpu


# ----------------------------- helpers --------------------------------------


def _round_up(x, m):
    return (x + m - 1) // m * m


def _balanced_tile(dim, target, granularity):
    """Smallest granularity-aligned tile that covers `dim` using the same number of
    tiles a `target`-sized tile would need (avoids a mostly-padding trailing tile)."""
    dim = max(int(dim), 1)
    n_tiles = max(1, -(-dim // target))          # ceil(dim / target)
    return _round_up(-(-dim // n_tiles), granularity)


def _vmem_budget_bytes():
    """Generation-aware VMEM budget (leave headroom for compiler scratch)."""
    try:
        cap = pltpu.get_tpu_info().vmem_capacity_bytes
    except Exception:
        cap = 64 * 1024 * 1024                   # v7x per-TC VMEM: smallest in fleet
    return int(cap) * 3 // 4


def _working_set_bytes(tm, tn, tk, compute_itemsize, out_itemsize, with_scratch):
    b = 2 * tm * tk * compute_itemsize           # x tile, double-buffered
    b += 2 * tk * tn * compute_itemsize          # W tile, double-buffered
    b += 2 * 1 * tn * 4                          # bias tile (f32), double-buffered
    b += 2 * tm * tn * out_itemsize              # output tile, double-buffered
    if with_scratch:
        b += tm * tn * 4                         # f32 accumulator scratch
    return b


# ----------------------------- kernels --------------------------------------


def _linear_kernel_f32_out(x_ref, w_ref, b_ref, o_ref):
    """f32-output path: accumulate directly in the resident output block."""
    k = pl.program_id(2)

    @pl.when(k == 0)
    def _():
        o_ref[...] = jnp.zeros_like(o_ref)

    # x: [tm, tk] (bf16), w: [tk, tn] (bf16, pre-transposed [K, H]) -> f32 MXU acc.
    o_ref[...] += jnp.dot(x_ref[...], w_ref[...],
                          preferred_element_type=jnp.float32)

    @pl.when(k == pl.num_programs(2) - 1)
    def _():
        o_ref[...] += b_ref[...]


def _linear_kernel_acc(x_ref, w_ref, b_ref, o_ref, acc_ref):
    """Low-precision output path: f32 scratch accumulator, cast at finalize."""
    k = pl.program_id(2)

    @pl.when(k == 0)
    def _():
        acc_ref[...] = jnp.zeros_like(acc_ref)

    acc_ref[...] += jnp.dot(x_ref[...], w_ref[...],
                            preferred_element_type=jnp.float32)

    @pl.when(k == pl.num_programs(2) - 1)
    def _():
        o_ref[...] = (acc_ref[...] + b_ref[...]).astype(o_ref.dtype)


# ----------------------------- wrappers -------------------------------------


def prepare_params(weight, bias, *, compute_dtype=jnp.bfloat16,
                   tm_target=512, tn_target=2048, tk_target=2048):
    """One-time parameter prep (call at init, NOT per forward call).

    weight: [hidden_size, input_size] (PyTorch nn.Linear layout)
    bias:   [hidden_size]
    Returns a dict with the [K, H]-transposed, lane-padded, compute-dtype weight,
    the padded f32 bias and the (tn, tk) tile sizes the kernel will use.
    """
    hidden, in_size = weight.shape
    cdt = jnp.dtype(compute_dtype)
    csize = cdt.itemsize
    sub = 16 if csize == 2 else 8                 # bf16 packs 2 rows per sublane

    budget = _vmem_budget_bytes()
    tn = _balanced_tile(hidden, tn_target, 128)
    tk = _balanced_tile(in_size, tk_target, 128)
    tm_budget = _round_up(min(tm_target, max(tm_target, sub)), sub)

    # Shrink tiles (K first, then H) until the worst-case working set fits VMEM.
    while _working_set_bytes(tm_budget, tn, tk, csize, 4, True) > budget and tk > 512:
        tk = max(128, _round_up(tk // 2, 128))
    while _working_set_bytes(tm_budget, tn, tk, csize, 4, True) > budget and tn > 512:
        tn = max(128, _round_up(tn // 2, 128))

    kp = _round_up(in_size, tk)
    hp = _round_up(hidden, tn)

    # Pre-transpose to [K, H], pad to full tiles, cast to the MXU-native dtype.
    w_kh = jnp.pad(weight.T.astype(cdt), ((0, kp - in_size), (0, hp - hidden)))
    b_p = jnp.pad(bias.astype(jnp.float32), (0, hp - hidden)).reshape(1, hp)

    return dict(w=w_kh, b=b_p, tn=tn, tk=tk, tm_target=tm_target,
                hidden=hidden, in_size=in_size, compute_dtype=cdt)


def slstm_block_forward(x, params):
    """Pallas equivalent of sLSTMBlock.forward: y = x @ W.T + b over the last axis.

    x: [..., input_size]; params from prepare_params(); returns [..., hidden_size]
    in x.dtype.
    """
    in_size = params["in_size"]
    hidden = params["hidden"]
    assert x.shape[-1] == in_size, "last dim of x must equal input_size"

    cdt = params["compute_dtype"]
    csize = cdt.itemsize
    sub = 16 if csize == 2 else 8

    lead = x.shape[:-1]
    m = 1
    for d in lead:
        m *= d
    m = max(m, 1)

    tn, tk = params["tn"], params["tk"]
    w_p, b_p = params["w"], params["b"]
    kp, hp = w_p.shape

    out_dtype = x.dtype
    osize = jnp.dtype(out_dtype).itemsize
    use_scratch = out_dtype != jnp.float32

    budget = _vmem_budget_bytes()
    tm = _balanced_tile(m, params["tm_target"], sub)
    while _working_set_bytes(tm, tn, tk, csize, osize, use_scratch) > budget and tm > sub:
        tm = max(sub, _round_up(tm // 2, sub))
    mp = _round_up(m, tm)

    # Ensure >= 2 blocks along the 'parallel' (M, H) axes when possible so both
    # v7x TensorCores get work; no-op / harmless on single-core chips.
    if (mp // tm) * (hp // tn) < 2 and m > sub:
        tm = _round_up(-(-m // 2), sub)
        mp = _round_up(m, tm)

    # Only per-call data prep: cast x to the compute dtype and pad to full tiles.
    x_pad = jnp.pad(x.reshape(m, in_size).astype(cdt),
                    ((0, mp - m), (0, kp - in_size)))

    grid = (mp // tm, hp // tn, kp // tk)
    kernel = _linear_kernel_acc if use_scratch else _linear_kernel_f32_out
    scratch = [pltpu.VMEM((tm, tn), jnp.float32)] if use_scratch else []

    ws = _working_set_bytes(tm, tn, tk, csize, osize, use_scratch)
    vmem_limit = int(min(budget, max(ws + (4 << 20), 16 << 20)))

    out = pl.pallas_call(
        kernel,
        out_shape=jax.ShapeDtypeStruct((mp, hp), out_dtype),
        grid_spec=pltpu.PrefetchScalarGridSpec(
            num_scalar_prefetch=0,
            grid=grid,
            in_specs=[
                pl.BlockSpec((tm, tk), lambda i, j, k: (i, k)),   # x tile
                pl.BlockSpec((tk, tn), lambda i, j, k: (k, j)),   # W tile ([K, H])
                pl.BlockSpec((1, tn), lambda i, j, k: (0, j)),    # bias tile
            ],
            out_specs=pl.BlockSpec((tm, tn), lambda i, j, k: (i, j)),
            scratch_shapes=scratch,
        ),
        compiler_params=pltpu.CompilerParams(
            dimension_semantics=("parallel", "parallel", "arbitrary"),
            vmem_limit_bytes=vmem_limit,
        ),
        cost_estimate=pl.CostEstimate(
            flops=2 * m * in_size * hidden,
            transcendentals=0,
            bytes_accessed=int(m * in_size * csize + kp * hp * csize
                               + hp * 4 + m * hidden * osize),
        ),
    )(x_pad, w_p, b_p)

    return out[:m, :hidden].reshape(*lead, hidden)


def init_params(key, input_size, hidden_size, dtype=jnp.float32):
    # Deterministic init mimicking nn.Linear's uniform(-1/sqrt(in), 1/sqrt(in)).
    kw, kb = jax.random.split(key)
    bound = 1.0 / (input_size ** 0.5)
    weight = jax.random.uniform(kw, (hidden_size, input_size), dtype,
                                minval=-bound, maxval=bound)
    bias = jax.random.uniform(kb, (hidden_size,), dtype,
                              minval=-bound, maxval=bound)
    return weight, bias


if __name__ == "__main__":
    key = jax.random.PRNGKey(0)
    k_x, k_p = jax.random.split(key)

    batch, seq, input_size, hidden_size = 2, 8, 32, 32
    x = jax.random.normal(k_x, (batch, seq, input_size), dtype=jnp.float32)
    weight, bias = init_params(k_p, input_size, hidden_size)

    params = prepare_params(weight, bias)          # one-time param prep (hoisted)
    fwd = jax.jit(lambda xx: slstm_block_forward(xx, params))

    y = jax.block_until_ready(fwd(x))

    # Reference check: full-precision f32 linear. The kernel feeds bf16 to the MXU
    # with an f32 accumulator, so allow bf16-level input-rounding error.
    y_ref = jnp.einsum("bsk,hk->bsh", x, weight,
                       precision=jax.lax.Precision.HIGHEST) + bias
    assert y.shape == (batch, seq, hidden_size)
    assert y.dtype == x.dtype
    assert jnp.allclose(y, y_ref, atol=2e-2, rtol=2e-2), float(
        jnp.max(jnp.abs(y - y_ref)))

    print("KERNEL_OK")
</pallas_src>

<mosaic_0001>
module attributes {stable_mosaic.version = 11 : i64} {
  func.func @_linear_kernel_f32_out(%arg0: i32, %arg1: i32, %arg2: i32, %arg3: memref<16x128xbf16, #tpu.memory_space<vmem>>, %arg4: memref<128x128xbf16, #tpu.memory_space<vmem>>, %arg5: memref<1x128xf32, #tpu.memory_space<vmem>>, %arg6: memref<16x128xf32, #tpu.memory_space<vmem>>) attributes {dimension_semantics = [#tpu.dimension_semantics<parallel>, #tpu.dimension_semantics<parallel>, #tpu.dimension_semantics<arbitrary>], iteration_bounds = array<i64: 1, 1, 1>, scalar_prefetch = 0 : i64, scratch_operands = 0 : i64, tpu.core_type = #tpu.core_type<tc>, window_params = [{transform_indices = @transform_0, window_bounds = array<i64: 16, 128>}, {transform_indices = @transform_1, window_bounds = array<i64: 128, 128>}, {transform_indices = @transform_2, window_bounds = array<i64: 1, 128>}, {transform_indices = @transform_3, window_bounds = array<i64: 16, 128>}]} {
    %c0_i32 = arith.constant 0 : i32
    %0 = arith.cmpi eq, %arg2, %c0_i32 : i32
    %1 = arith.extui %0 : i1 to i32
    %c0_i32_0 = arith.constant 0 : i32
    %2 = arith.cmpi ne, %1, %c0_i32_0 : i32
    scf.if %2 {
      %cst_10 = arith.constant 0.000000e+00 : f32
      %12 = vector.broadcast %cst_10 : f32 to vector<16x128xf32>
      %c0_11 = arith.constant 0 : index
      %c0_12 = arith.constant 0 : index
      %13 = vector.load %arg6[%c0_11, %c0_12] : memref<16x128xf32, #tpu.memory_space<vmem>>, vector<16x128xf32>
      tpu.vector_store %arg6[%c0_11, %c0_12], %12 {strides = array<i32>} : memref<16x128xf32, #tpu.memory_space<vmem>>, vector<16x128xf32>,
    } else {
    }
    %c0 = arith.constant 0 : index
    %c0_1 = arith.constant 0 : index
    %3 = vector.load %arg6[%c0, %c0_1] : memref<16x128xf32, #tpu.memory_space<vmem>>, vector<16x128xf32>
    %c0_2 = arith.constant 0 : index
    %c0_3 = arith.constant 0 : index
    %4 = vector.load %arg3[%c0_2, %c0_3] : memref<16x128xbf16, #tpu.memory_space<vmem>>, vector<16x128xbf16>
    %c0_4 = arith.constant 0 : index
    %c0_5 = arith.constant 0 : index
    %5 = vector.load %arg4[%c0_4, %c0_5] : memref<128x128xbf16, #tpu.memory_space<vmem>>, vector<128x128xbf16>
    %cst = arith.constant dense<0.000000e+00> : vector<16x128xf32>
    %6 = tpu.matmul %4, %5, %cst {dimension_numbers = #tpu.dot_dimension_numbers<[1], [0], [0], [1], [0, 0, 1, 1], [], []>} : vector<16x128xbf16>, vector<128x128xbf16>, vector<16x128xf32> -> vector<16x128xf32>
    %7 = arith.addf %3, %6 : vector<16x128xf32>
    %c0_6 = arith.constant 0 : index
    %c0_7 = arith.constant 0 : index
    %8 = vector.load %arg6[%c0_6, %c0_7] : memref<16x128xf32, #tpu.memory_space<vmem>>, vector<16x128xf32>
    tpu.vector_store %arg6[%c0_6, %c0_7], %7 {strides = array<i32>} : memref<16x128xf32, #tpu.memory_space<vmem>>, vector<16x128xf32>,
    %c0_i32_8 = arith.constant 0 : i32
    %9 = arith.cmpi eq, %arg2, %c0_i32_8 : i32
    %10 = arith.extui %9 : i1 to i32
    %c0_i32_9 = arith.constant 0 : i32
    %11 = arith.cmpi ne, %10, %c0_i32_9 : i32
    scf.if %11 {
      %c0_10 = arith.constant 0 : index
      %c0_11 = arith.constant 0 : index
      %12 = vector.load %arg6[%c0_10, %c0_11] : memref<16x128xf32, #tpu.memory_space<vmem>>, vector<16x128xf32>
      %c0_12 = arith.constant 0 : index
      %c0_13 = arith.constant 0 : index
      %13 = vector.load %arg5[%c0_12, %c0_13] : memref<1x128xf32, #tpu.memory_space<vmem>>, vector<1x128xf32>
      %14 = vector.broadcast %13 : vector<1x128xf32> to vector<16x128xf32>
      %15 = arith.addf %12, %14 : vector<16x128xf32>
      %c0_14 = arith.constant 0 : index
      %c0_15 = arith.constant 0 : index
      %16 = vector.load %arg6[%c0_14, %c0_15] : memref<16x128xf32, #tpu.memory_space<vmem>>, vector<16x128xf32>
      tpu.vector_store %arg6[%c0_14, %c0_15], %15 {strides = array<i32>} : memref<16x128xf32, #tpu.memory_space<vmem>>, vector<16x128xf32>,
    } else {
    }
    return
  }
  func.func @transform_0(%arg0: i32, %arg1: i32, %arg2: i32) -> (i32, i32) {
    %c0_i32 = arith.constant 0 : i32
    return %arg0, %arg2 : i32, i32
  }
  func.func @transform_1(%arg0: i32, %arg1: i32, %arg2: i32) -> (i32, i32) {
    %c0_i32 = arith.constant 0 : i32
    return %arg2, %arg1 : i32, i32
  }
  func.func @transform_2(%arg0: i32, %arg1: i32, %arg2: i32) -> (i32, i32) {
    %c0_i32 = arith.constant 0 : i32
    %c0_i32_0 = arith.constant 0 : i32
    return %c0_i32, %arg1 : i32, i32
  }
  func.func @transform_3(%arg0: i32, %arg1: i32, %arg2: i32) -> (i32, i32) {
    %c0_i32 = arith.constant 0 : i32
    return %arg0, %arg1 : i32, i32
  }
}

</mosaic_0001>

<llo_original>
// kernel: _lambda_.1
$region0: #{_lambda_.1}
  #allocation0 [shape = 'u32[]', space=smem, size = 0x4, offset = 0x4, fixed_abs, tag = 'smem constant byte address 0x4 - core index']
  #allocation1 [shape = 'u32[144,128]{1,0:T(1,128)}', space=vmem, size = 0x12000, scoped, tag = 'internal scratch']
  %s0 = inlined_call_operand.vmem [shape: bf16[16,128], index: 0, kind: input, shape index: {}]
  %s1 = inlined_call_operand.hbm [shape: bf16[128,128], index: 1, kind: input, shape index: {}]
  %s2 = inlined_call_operand.vmem [shape: f32[1,128], index: 2, kind: input, shape index: {}]
  %s3 = inlined_call_operand.vmem [shape: f32[16,128], index: 3, kind: output, shape index: {}]
  %s4 = sld [smem:[#allocation0]]
  $region34: #{_lambda_.1} parent=0
    _
  %s6 = ssub.s32 1, %s4
  %s7 = scalar_select 0, %s6, %s4
  $region1: #{_lambda_.1} parent=0
    #allocation2 [shape = 'u8[32768]{0}', space=vmem, size = 0x8000, scoped, tag = 'input window, operand 1, single buffered']
    #allocation3 [shape = 's32[1]{0}', space=sflag, size = 0x4, scoped, tag = 'scoped memory for _lambda_.1']
    %8 = vsyncpa [#allocation3], 0
    // Predicated region
    $region2: #{_lambda_.1} parent=1 // pred_check
      _
    $region3: #{_lambda_.1} parent=1 // pred_check_branch
      %10 = sbr.rel (0) target = $region5
    $region4: #{_lambda_.1} parent=1 // pred_region
      _
    $region5: #{_lambda_.1} parent=1 // pred_fallthru
      _
    // Predicated region
    $region6: #{_lambda_.1} parent=1 // pred_check
      _
    $region7: #{_lambda_.1} parent=1 // pred_check_branch
      %12 = sbr.rel (0) target = $region9
    $region8: #{_lambda_.1} parent=1 // pred_region
      %s14 = ssub.s32 1024, 1024
      %15 = vsyncadd [#allocation3], %s14
      %s16 = sshll.u32 [#allocation2], 4
      %s17 = int_to_ptr.vmem [resolvable:$true] %s16
      %22 = dma.hbm_to_vmem [thread:$0]  %s1, 1024, %s17, [#allocation3], 64, 64, 4
    $region9: #{_lambda_.1} parent=1 // pred_fallthru
      _
    // Predicated region
    $region10: #{_lambda_.1} parent=1 // pred_check
      _
    $region11: #{_lambda_.1} parent=1 // pred_check_branch
      %24 = sbr.rel (0) target = $region13
    $region12: #{_lambda_.1} parent=1 // pred_region
      _
    $region13: #{_lambda_.1} parent=1 // pred_fallthru
      _
    // Predicated region
    $region14: #{_lambda_.1} parent=1 // pred_check
      _
    $region15: #{_lambda_.1} parent=1 // pred_check_branch
      %26 = sbr.rel (0) target = $region17
    $region16: #{_lambda_.1} parent=1 // pred_region
      %27 = dma.done [#allocation3], 1024
    $region17: #{_lambda_.1} parent=1 // pred_fallthru
      _
    %p29 = scmp.eq.s32.totalorder 0, 0
    // Predicated region
    $region18: #{_lambda_.1} parent=1 // pred_check
      %p30 = pneg %p29
    $region19: #{_lambda_.1} parent=1 // pred_check_branch
      %32 = sbr.rel (%p30) target = $region21
    $region20: #{_lambda_.1} parent=1 // pred_region
      %33 = vst [vmem:[%s3] sm:$0xff] 0.0
      %34 = vst [vmem:[%s3 + $0x8] sm:$0xff] 0.0
    $region21: #{_lambda_.1} parent=1 // pred_fallthru
      _
    %v35 = vld [vmem:[%s3] sm:$0xff]
    %v36 = vld [vmem:[%s3 + $0x8] sm:$0xff]
    %v37 = vld [vmem:[%s0] sm:$0xf]
    %v38 = vld [vmem:[%s0 + $0x4] sm:$0xf]
    %v39 = vld [vmem:[#allocation2] sm:$0xf]
    %v40 = vld [vmem:[#allocation2 + $0x4] sm:$0xf]
    %v41 = vld [vmem:[#allocation2 + $0x8] sm:$0xf]
    %v42 = vld [vmem:[#allocation2 + $0xc] sm:$0xf]
    %v43 = vld [vmem:[#allocation2 + $0x10] sm:$0xf]
    %v44 = vld [vmem:[#allocation2 + $0x14] sm:$0xf]
    %v45 = vld [vmem:[#allocation2 + $0x18] sm:$0xf]
    %v46 = vld [vmem:[#allocation2 + $0x1c] sm:$0xf]
    %v47 = vld [vmem:[#allocation2 + $0x20] sm:$0xf]
    %v48 = vld [vmem:[#allocation2 + $0x24] sm:$0xf]
    %v49 = vld [vmem:[#allocation2 + $0x28] sm:$0xf]
    %v50 = vld [vmem:[#allocation2 + $0x2c] sm:$0xf]
    %v51 = vld [vmem:[#allocation2 + $0x30] sm:$0xf]
    %v52 = vld [vmem:[#allocation2 + $0x34] sm:$0xf]
    %v53 = vld [vmem:[#allocation2 + $0x38] sm:$0xf]
    %v54 = vld [vmem:[#allocation2 + $0x3c] sm:$0xf]
    %v57 = vunpack.c.l.b16 %v37
    %v58 = vunpack.c.l.b16 %v38
    %v59 = vpack.c.b16 %v58, %v57
    %v77 = vunpack.c.l.b16 %v39
    %v78 = vunpack.c.l.b16 %v40
    %v79 = vunpack.c.l.b16 %v41
    %v80 = vunpack.c.l.b16 %v42
    %v81 = vunpack.c.l.b16 %v43
    %v82 = vunpack.c.l.b16 %v44
    %v83 = vunpack.c.l.b16 %v45
    %v84 = vunpack.c.l.b16 %v46
    %v85 = vunpack.c.l.b16 %v47
    %v86 = vunpack.c.l.b16 %v48
    %v87 = vunpack.c.l.b16 %v49
    %v88 = vunpack.c.l.b16 %v50
    %v89 = vunpack.c.l.b16 %v51
    %v90 = vunpack.c.l.b16 %v52
    %v91 = vunpack.c.l.b16 %v53
    %v92 = vunpack.c.l.b16 %v54
    %v93 = vpack.c.b16 %v78, %v77
    %v94 = vpack.c.b16 %v80, %v79
    %v95 = vpack.c.b16 %v82, %v81
    %v96 = vpack.c.b16 %v84, %v83
    %v97 = vpack.c.b16 %v86, %v85
    %v98 = vpack.c.b16 %v88, %v87
    %v99 = vpack.c.b16 %v90, %v89
    %v100 = vpack.c.b16 %v92, %v91
    %109 = vmatprep.subr.bf16.mxu0 0
    %110 = vmatpush1.bf16.msra.mxu0 %v100
    %111 = vmatprep.subr.bf16.mxu0 0
    %112 = vmatpush1.bf16.msra.mxu0 %v99
    %113 = vmatprep.subr.bf16.mxu0 0
    %114 = vmatpush1.bf16.msra.mxu0 %v98
    %115 = vmatprep.subr.bf16.mxu0 0
    %116 = vmatpush1.bf16.msra.mxu0 %v97
    %117 = vmatprep.subr.bf16.mxu0 0
    %118 = vmatpush1.bf16.msra.mxu0 %v96
    %119 = vmatprep.subr.bf16.mxu0 0
    %120 = vmatpush1.bf16.msra.mxu0 %v95
    %121 = vmatprep.subr.bf16.mxu0 0
    %122 = vmatpush1.bf16.msra.mxu0 %v94
    %123 = vmatprep.subr.bf16.mxu0 0
    %124 = vmatpush1.bf16.msra.mxu0 %v93
    %125 = vmatprep.subr.bf16.mxu0 0
    %126 = vmatpush2.bf16.msra.mxu0 0
    %127 = vmatprep.subr.bf16.mxu0 0
    %128 = vmatpush2.bf16.msra.mxu0 0
    %129 = vmatprep.subr.bf16.mxu0 0
    %130 = vmatpush2.bf16.msra.mxu0 0
    %131 = vmatprep.subr.bf16.mxu0 0
    %132 = vmatpush2.bf16.msra.mxu0 0
    %133 = vmatprep.subr.bf16.mxu0 0
    %134 = vmatpush2.bf16.msra.mxu0 0
    %135 = vmatprep.subr.bf16.mxu0 0
    %136 = vmatpush2.bf16.msra.mxu0 0
    %137 = vmatprep.subr.bf16.mxu0 0
    %138 = vmatpush2.bf16.msra.mxu0 0
    %139 = vmatprep.subr.bf16.mxu0 0
    %140 = vmatpush2.bf16.msra.mxu0 0
    %141 = vmatprep.mubr.bf16.mxu0 0
    %142 = vmatmul.mubr.bf16.gmra.mxu0 %v59
    %v143 = vpop.f32.mrf.mxu0
    %v144 = vadd.f32 0.0, %v143
    %v145 = vpop.f32.mrf.mxu0
    %v146 = vpop.f32.mrf.mxu0
    %v147 = vadd.f32 0.0, %v146
    %v148 = vpop.f32.mrf.mxu0
    %149 = vdwg.mxu0
    %v150 = vadd.f32 %v35, %v144
    %v151 = vadd.f32 %v36, %v147
    %152 = vst [vmem:[%s3] sm:$0xff] %v150
    %153 = vst [vmem:[%s3 + $0x8] sm:$0xff] %v151
    // Predicated region
    $region22: #{_lambda_.1} parent=1 // pred_check
      %p154 = pneg %p29
    $region23: #{_lambda_.1} parent=1 // pred_check_branch
      %156 = sbr.rel (%p154) target = $region25
    $region24: #{_lambda_.1} parent=1 // pred_region
      %v157 = vld [vmem:[%s3] sm:$0xff]
      %v158 = vld [vmem:[%s3 + $0x8] sm:$0xff]
      %v159 = vld [vmem:[%s2] sm:$0x1]
      %v161 = vlaneseq
      %v162 = vshrl.u32 %v161, 7
      %v163 = vsub.s32 0, %v162
      %v164 = vrot.slane %v159, %v163
      %v166 = vadd.f32 %v157, %v164
      %v167 = vadd.f32 %v158, %v164
      %168 = vst [vmem:[%s3] sm:$0xff] %v166
      %169 = vst [vmem:[%s3 + $0x8] sm:$0xff] %v167
    $region25: #{_lambda_.1} parent=1 // pred_fallthru
      _
    // Predicated region
    $region26: #{_lambda_.1} parent=1 // pred_check
      _
    $region27: #{_lambda_.1} parent=1 // pred_check_branch
      %171 = sbr.rel (0) target = $region29
    $region28: #{_lambda_.1} parent=1 // pred_region
      _
    $region29: #{_lambda_.1} parent=1 // pred_fallthru
      _
    // Predicated region
    $region30: #{_lambda_.1} parent=1 // pred_check
      _
    $region31: #{_lambda_.1} parent=1 // pred_check_branch
      %173 = sbr.rel (0) target = $region33
    $region32: #{_lambda_.1} parent=1 // pred_region
      _
    $region33: #{_lambda_.1} parent=1 // pred_fallthru
      _
    %174 = vsyncpa [#allocation3], 1

</llo_original>
